<compile_context>
chip_gen: v7x
topology: tpu7x:2x2x1
jax: 0.10.0
libtpu: 0.0.40
codegen_flags: <defaults>
</compile_context>

<pallas_src>
import functools

import jax
import jax.numpy as jnp
from jax.experimental import pallas as pl
from jax.experimental.pallas import tpu as pltpu


_TARGET_BLOCK_BYTES = 4 * 1024 * 1024  # ~4 MiB/block; in+out double-buffered ≈ 16 MiB VMEM


def _sublane_pack(itemsize):
    return {1: 32, 2: 16, 4: 8}.get(itemsize, 8)


def _choose_seq_tile(S, H, itemsize):
    """Sequence-tile length: multiple of the sublane pack, ~_TARGET_BLOCK_BYTES."""
    pack = _sublane_pack(itemsize)
    ts = (_TARGET_BLOCK_BYTES // max(1, H * itemsize)) // pack * pack
    ts = max(pack, ts)
    if ts >= S:
        ts = S  # a full-extent block is always a legal block shape
    return ts


# ---------------------------------------------------------------------------
# Kernels
# ---------------------------------------------------------------------------

def _sparsify_tail_kernel(x_ref, thr_ref, o_ref, *, boundary_offset, has_boundary):
    """Sparsify one (1, TS, H) sequence tile of the prefill back half.

    Only the boundary tile (the tile containing seq position ceil(S/2)) needs a
    per-element sequence mask; all other scheduled tiles are fully sparsified.
    """
    x = x_ref[...]
    thr = thr_ref[0, 0].astype(x.dtype)  # compare in x.dtype (matches torch abs().gt(thresh))
    sparsified = jnp.where(jnp.abs(x) > thr, x, jnp.zeros_like(x))
    if has_boundary:
        @pl.when(pl.program_id(1) == 0)
        def _():
            seq_idx = jax.lax.broadcasted_iota(jnp.int32, x.shape, dimension=1)
            o_ref[...] = jnp.where(seq_idx < boundary_offset, x, sparsified)

        @pl.when(pl.program_id(1) > 0)
        def _():
            o_ref[...] = sparsified
    else:
        o_ref[...] = sparsified


def _sparsify_all_kernel(x_ref, thr_ref, o_ref):
    """Sparsify a full (rows, H) tile (decode path)."""
    x = x_ref[...]
    thr = thr_ref[0, 0].astype(x.dtype)
    o_ref[...] = jnp.where(jnp.abs(x) > thr, x, jnp.zeros_like(x))


# ---------------------------------------------------------------------------
# Wrappers
# ---------------------------------------------------------------------------

def _prefill_sparsify(x, thr_arr, seq_tile=None):
    B, S, H = x.shape
    itemsize = jnp.dtype(x.dtype).itemsize
    pack = _sublane_pack(itemsize)
    start_apply = S - S // 2  # first sparsified sequence position (= ceil(S/2))

    if seq_tile is not None:
        ts = int(seq_tile)
        if ts >= S:
            ts = S
        elif ts % pack != 0:
            ts = max(pack, (ts // pack) * pack)
    else:
        ts = _choose_seq_tile(S, H, itemsize)

    n_tiles = pl.cdiv(S, ts)
    start_tile = start_apply // ts            # tiles [0, start_tile) are pure pass-through
    n_apply_tiles = n_tiles - start_tile      # only these tiles are scheduled / DMA'd
    boundary_offset = start_apply - start_tile * ts  # in-tile split of the boundary tile

    kernel = functools.partial(
        _sparsify_tail_kernel,
        boundary_offset=boundary_offset,
        has_boundary=boundary_offset > 0,
    )

    return pl.pallas_call(
        kernel,
        out_shape=jax.ShapeDtypeStruct(x.shape, x.dtype),
        grid=(B, n_apply_tiles),
        in_specs=[
            pl.BlockSpec((1, ts, H), lambda b, s: (b, start_tile + s, 0)),
            pl.BlockSpec(memory_space=pltpu.MemorySpace.SMEM),  # threshold scalar
        ],
        out_specs=pl.BlockSpec((1, ts, H), lambda b, s: (b, start_tile + s, 0)),
        input_output_aliases={0: 0},  # untouched front-half tiles pass through in place
        compiler_params=pltpu.CompilerParams(
            dimension_semantics=("parallel", "parallel")),
    )(x, thr_arr)


def _decode_sparsify(x, thr_arr):
    B, S, H = x.shape  # S == 1
    itemsize = jnp.dtype(x.dtype).itemsize
    pack = _sublane_pack(itemsize)
    x2 = x.reshape(B, H)  # lane-dense 2-D view (free at the XLA level)

    tr = max(pack, (_TARGET_BLOCK_BYTES // max(1, H * itemsize)) // pack * pack)
    if tr >= B:
        tr = B
    n_tiles = pl.cdiv(B, tr)

    out2 = pl.pallas_call(
        _sparsify_all_kernel,
        out_shape=jax.ShapeDtypeStruct((B, H), x.dtype),
        grid=(n_tiles,),
        in_specs=[
            pl.BlockSpec((tr, H), lambda r: (r, 0)),
            pl.BlockSpec(memory_space=pltpu.MemorySpace.SMEM),
        ],
        out_specs=pl.BlockSpec((tr, H), lambda r: (r, 0)),
        compiler_params=pltpu.CompilerParams(dimension_semantics=("parallel",)),
    )(x2, thr_arr)
    return out2.reshape(B, S, H)


def sparsify_forward(x, threshold, *, apply_prefill=True, seq_tile=None):
    """Pallas implementation of SparsifyFn.forward.

    x: (B, S, H) array.  threshold: scalar (python float or JAX scalar).
    seq_tile: optional explicit sequence-tile override (testing / tuning).
    """
    B, S, H = x.shape
    if S > 1 and not apply_prefill:
        return x
    thr_arr = jnp.asarray(threshold, dtype=jnp.float32).reshape(1, 1)
    if S > 1:
        return _prefill_sparsify(x, thr_arr, seq_tile=seq_tile)
    return _decode_sparsify(x, thr_arr)


# Production entry point: donating x lets XLA honor input_output_aliases, so the
# untouched prefill front half never moves through HBM (≈2x less traffic).
sparsify_forward_donated = jax.jit(
    sparsify_forward,
    static_argnames=("apply_prefill", "seq_tile"),
    donate_argnums=(0,),
)


def sparsify_reference(x, threshold, apply_prefill=True):
    """Pure-JAX reference mirroring the PyTorch forward exactly."""
    B, S, H = x.shape
    if S > 1 and apply_prefill:
        half = S // 2
        front = x[:, : S - half, :]
        back = x[:, S - half:, :]
        back = jnp.where(jnp.abs(back) > threshold, back, jnp.zeros_like(back))
        return jnp.concatenate([front, back], axis=1)
    if S > 1 and not apply_prefill:
        return x
    return jnp.where(jnp.abs(x) > threshold, x, jnp.zeros_like(x))


if __name__ == "__main__":
    # Mimic SparsifyFn.set_threshold(sparsity) with a standard Normal distr:
    # thresh = Phi^{-1}(0.5 + sparsity/2).
    sparsity = 0.5
    p = 0.5 + sparsity / 2.0
    threshold = float(
        jnp.sqrt(2.0) * jax.lax.erf_inv(jnp.float32(2.0 * p - 1.0))
    )  # ~0.6745

    key = jax.random.PRNGKey(0)
    k0, k1, k2 = jax.random.split(key, 3)

    # 1) Prefill path (S > 1), donated entry point (in-place back-half update).
    B, S, H = 2, 8, 128
    x = jax.random.normal(k0, (B, S, H), dtype=jnp.float32)
    ref = sparsify_reference(x, threshold, apply_prefill=True)
    out = jax.block_until_ready(sparsify_forward_donated(x, threshold))
    assert jnp.allclose(out, ref), "prefill path mismatch"

    # 2) Prefill path with explicit multi-tile sequence tiling: boundary tile
    #    not tile-aligned and a ragged last tile.
    x2 = jax.random.normal(k1, (2, 20, 128), dtype=jnp.float32)
    ref2 = sparsify_reference(x2, threshold, apply_prefill=True)
    out2 = jax.block_until_ready(sparsify_forward(x2, threshold, seq_tile=8))
    assert jnp.allclose(out2, ref2), "tiled prefill path mismatch"

    # 3) apply_prefill=False -> identity.
    out3 = jax.block_until_ready(sparsify_forward(x2, threshold, apply_prefill=False))
    assert jnp.allclose(out3, x2), "identity path mismatch"

    # 4) Decode path (S == 1).
    x_dec = jax.random.normal(k2, (2, 1, 128), dtype=jnp.float32)
    ref_dec = sparsify_reference(x_dec, threshold, apply_prefill=True)
    out_dec = jax.block_until_ready(sparsify_forward(x_dec, threshold))
    assert jnp.allclose(out_dec, ref_dec), "decode path mismatch"

    print("KERNEL_OK")
</pallas_src>

<mosaic_0001>
module attributes {stable_mosaic.version = 11 : i64} {
  func.func @_sparsify_tail_kernel(%arg0: i32, %arg1: i32, %arg2: memref<1x8x128xf32, #tpu.memory_space<vmem>>, %arg3: memref<1x1xf32, #tpu.memory_space<smem>>, %arg4: memref<1x8x128xf32, #tpu.memory_space<vmem>>) attributes {dimension_semantics = [#tpu.dimension_semantics<parallel>, #tpu.dimension_semantics<parallel>], iteration_bounds = array<i64: 2, 1>, scalar_prefetch = 0 : i64, scratch_operands = 0 : i64, tpu.core_type = #tpu.core_type<tc>, window_params = [{transform_indices = @transform_0, window_bounds = array<i64: 1, 8, 128>}, {transform_indices = @transform_1, window_bounds = array<i64: 1, 1>}, {transform_indices = @transform_2, window_bounds = array<i64: 1, 8, 128>}]} {
    %c0 = arith.constant 0 : index
    %c0_0 = arith.constant 0 : index
    %c0_1 = arith.constant 0 : index
    %0 = vector.load %arg2[%c0, %c0_0, %c0_1] : memref<1x8x128xf32, #tpu.memory_space<vmem>>, vector<1x8x128xf32>
    %c0_2 = arith.constant 0 : index
    %c0_3 = arith.constant 0 : index
    %1 = memref.load %arg3[%c0_2, %c0_3] : memref<1x1xf32, #tpu.memory_space<smem>>
    %2 = math.absf %0 : vector<1x8x128xf32>
    %3 = vector.broadcast %1 : f32 to vector<1x8x128xf32>
    %4 = arith.cmpf ogt, %2, %3 : vector<1x8x128xf32>
    %cst = arith.constant 0.000000e+00 : f32
    %5 = vector.broadcast %cst : f32 to vector<1x8x128xf32>
    %6 = arith.select %4, %0, %5 : vector<1x8x128xi1>, vector<1x8x128xf32>
    %c0_i32 = arith.constant 0 : i32
    %7 = arith.cmpi eq, %arg1, %c0_i32 : i32
    %8 = arith.extui %7 : i1 to i32
    %c0_i32_4 = arith.constant 0 : i32
    %9 = arith.cmpi ne, %8, %c0_i32_4 : i32
    scf.if %9 {
      %13 = tpu.iota {dimensions = array<i32: 1>} : vector<1x8x128xi32>
      %c4_i32 = arith.constant 4 : i32
      %14 = vector.broadcast %c4_i32 : i32 to vector<1x8x128xi32>
      %15 = arith.cmpi slt, %13, %14 : vector<1x8x128xi32>
      %16 = arith.select %15, %0, %6 : vector<1x8x128xi1>, vector<1x8x128xf32>
      %c0_7 = arith.constant 0 : index
      %c0_8 = arith.constant 0 : index
      %c0_9 = arith.constant 0 : index
      %17 = vector.load %arg4[%c0_7, %c0_8, %c0_9] : memref<1x8x128xf32, #tpu.memory_space<vmem>>, vector<1x8x128xf32>
      tpu.vector_store %arg4[%c0_7, %c0_8, %c0_9], %16 {strides = array<i32>} : memref<1x8x128xf32, #tpu.memory_space<vmem>>, vector<1x8x128xf32>,
    } else {
    }
    %c0_i32_5 = arith.constant 0 : i32
    %10 = arith.cmpi sgt, %arg1, %c0_i32_5 : i32
    %11 = arith.extui %10 : i1 to i32
    %c0_i32_6 = arith.constant 0 : i32
    %12 = arith.cmpi ne, %11, %c0_i32_6 : i32
    scf.if %12 {
      %c0_7 = arith.constant 0 : index
      %c0_8 = arith.constant 0 : index
      %c0_9 = arith.constant 0 : index
      %13 = vector.load %arg4[%c0_7, %c0_8, %c0_9] : memref<1x8x128xf32, #tpu.memory_space<vmem>>, vector<1x8x128xf32>
      tpu.vector_store %arg4[%c0_7, %c0_8, %c0_9], %6 {strides = array<i32>} : memref<1x8x128xf32, #tpu.memory_space<vmem>>, vector<1x8x128xf32>,
    } else {
    }
    return
  }
  func.func @transform_0(%arg0: i32, %arg1: i32) -> (i32, i32, i32) {
    %c0_i32 = arith.constant 0 : i32
    %0 = arith.addi %c0_i32, %arg1 : i32
    %c0_i32_0 = arith.constant 0 : i32
    %c0_i32_1 = arith.constant 0 : i32
    return %arg0, %0, %c0_i32_0 : i32, i32, i32
  }
  func.func @transform_1(%arg0: i32, %arg1: i32) -> (i32, i32) {
    %c0_i32 = arith.constant 0 : i32
    %c0_i32_0 = arith.constant 0 : i32
    %c0_i32_1 = arith.constant 0 : i32
    return %c0_i32, %c0_i32_0 : i32, i32
  }
  func.func @transform_2(%arg0: i32, %arg1: i32) -> (i32, i32, i32) {
    %c0_i32 = arith.constant 0 : i32
    %0 = arith.addi %c0_i32, %arg1 : i32
    %c0_i32_0 = arith.constant 0 : i32
    %c0_i32_1 = arith.constant 0 : i32
    return %arg0, %0, %c0_i32_0 : i32, i32, i32
  }
}

</mosaic_0001>

<llo_original>
// kernel: sparsify_forward.1
$region0: #{sparsify_forward.1}
  #allocation0 [shape = 'u32[]', space=smem, size = 0x4, offset = 0x4, fixed_abs, tag = 'smem constant byte address 0x4 - core index']
  #allocation1 [shape = 'u32[144,128]{1,0:T(1,128)}', space=vmem, size = 0x12000, scoped, tag = 'internal scratch']
  #allocation2 [shape = 'f32[1,1]{1,0:T(1,128)S(6)}', space=smem, size = 0x200, scoped, tag = 'scoped memory for sparsify_forward.1']
  %s0 = inlined_call_operand.hbm [shape: f32[2,8,128], index: 0, kind: input, shape index: {}, may-alias: {0,2}]
  %s1 = inlined_call_operand.<no memory space> [shape: f32[1,1], index: 1, kind: input, shape index: {}]
  %s2 = inlined_call_operand.hbm [shape: f32[2,8,128], index: 2, kind: output, shape index: {}, may-alias: {0,2}]
  %s3 = sld [smem:[#allocation0]]
  $region53: #{sparsify_forward.1} parent=0
    _
  %s5 = ssub.s32 1, %s3
  %s6 = scalar_select 0, %s5, %s3
  %7 = sst [smem:[#allocation2]] %s1
  $region1: #{sparsify_forward.1} parent=0
    #allocation3 [shape = 'u8[8192]{0}', space=vmem, size = 0x2000, scoped, tag = 'input window, operand 0']
    #allocation4 [shape = 's32[2]{0}', space=sflag, size = 0x8, scoped, tag = 'scoped memory for sparsify_forward.1']
    #allocation5 [shape = 's32[2]{0}', space=sflag, size = 0x8, scoped, tag = 'scoped memory for sparsify_forward.1']
    #allocation6 [shape = 'u8[8192]{0}', space=vmem, size = 0x2000, scoped, tag = 'output window, operand 0']
    %8 = vsyncpa [#allocation4], 0
    %s9 = scalar_lea.sflag [#allocation4], 1
    %10 = vsyncpa %s9, 0
    %11 = vsyncpa [#allocation5], 0
    %s12 = scalar_lea.sflag [#allocation5], 1
    %13 = vsyncpa %s12, 0
    loop: start=0, step=1, limit=4
    $region2: #{sparsify_forward.1} parent=1 // loop_pre_header
      _
    $region3: #{sparsify_forward.1} parent=1 // loop_header
      %s15 = sphi 0, %s19
      %p16 = scmp.ge.s32.totalorder %s15, 4
      %s22 = sphi 0, %s34
      %s23 = sphi 0, %s30
      %s24 = sphi 0, %s22
      %s25 = sphi 0, %s23
      %s26 = sphi 0, %s24
      %s27 = sphi 0, %s25
      %s39 = sphi 0, %s41
      %s42 = sphi 0, %s39
      %s43 = sphi 0, %s42
      %s59 = sphi 0, %s43
      %s63 = sphi 0, %s63
      %s65 = sphi 0, %s63
      %s66 = sphi 0, %s65
      %s80 = sphi 0, %s66
      %s88 = sphi 0, %s90
      %s91 = sphi 0, %s88
      %s92 = sphi 0, %s91
      %s108 = sphi 0, %s92
    $region4: #{sparsify_forward.1} parent=1 // loop_header_branch
      %18 = sbr.rel (%p16) target = $region8
    $region5: #{sparsify_forward.1} parent=1 // loop_body
      %s20 = ssub.s32 %s15, 1
      %s21 = ssub.s32 %s15, 2
      %s28 = sadd.s32 1, %s23
      %p29 = scmp.ge.s32.totalorder %s28, 1
      %s30 = scalar_select %p29, 0, %s28
      %s31 = sadd.s32 1, %s22
      %s32 = scalar_select %p29, %s31, %s22
      %p33 = scmp.ge.s32.totalorder %s32, 2
      %s34 = scalar_select %p33, 0, %s32
      %s35 = ssub.s32 %s22, %s34
      %s36 = ssub.s32 %s23, %s30
      %s37 = sor.u32 %s35, %s36
      %p38 = scmp.eq.s32.totalorder %s37, 0
      %s40 = sadd.s32 %s39, 1
      %s41 = scalar_select %p38, %s39, %s40
      %p44 = pneg %p38
      %p45 = scmp.eq.s32.totalorder %s15, 1
      %p46 = por %p44, %p45
      %p47 = scmp.ne.s32.totalorder %s39, %s42
      %p48 = scmp.eq.s32.totalorder %s15, 0
      %p49 = por %p47, %p48
      %p50 = scmp.ne.s32.totalorder %s39, %s42
      %p51 = scmp.eq.s32.totalorder %s20, 1
      %p52 = por %p50, %p51
      %p53 = scmp.ne.s32.totalorder %s42, %s43
      %p54 = scmp.eq.s32.totalorder %s20, 0
      %p55 = por %p53, %p54
      %p56 = scmp.ne.s32.totalorder %s42, %s43
      %p57 = scmp.eq.s32.totalorder %s21, 1
      %p58 = por %p56, %p57
      %p60 = scmp.ne.s32.totalorder %s43, %s59
      %p61 = scmp.eq.s32.totalorder %s21, 0
      %p62 = por %p60, %p61
      %s64 = sadd.s32 %s63, 1
      %p67 = scmp.eq.s32.totalorder %s15, 1
      %p68 = scmp.ne.s32.totalorder %s63, %s65
      %p69 = scmp.eq.s32.totalorder %s15, 0
      %p70 = por %p68, %p69
      %p71 = scmp.ne.s32.totalorder %s63, %s65
      %p72 = scmp.eq.s32.totalorder %s20, 1
      %p73 = por %p71, %p72
      %p74 = scmp.ne.s32.totalorder %s65, %s66
      %p75 = scmp.eq.s32.totalorder %s20, 0
      %p76 = por %p74, %p75
      %p77 = scmp.ne.s32.totalorder %s65, %s66
      %p78 = scmp.eq.s32.totalorder %s21, 1
      %p79 = por %p77, %p78
      %p81 = scmp.ne.s32.totalorder %s66, %s80
      %p82 = scmp.eq.s32.totalorder %s21, 0
      %p83 = por %p81, %p82
      %s84 = ssub.s32 %s22, %s34
      %s85 = ssub.s32 %s23, %s30
      %s86 = sor.u32 %s84, %s85
      %p87 = scmp.eq.s32.totalorder %s86, 0
      %s89 = sadd.s32 %s88, 1
      %s90 = scalar_select %p87, %s88, %s89
      %p93 = pneg %p87
      %p94 = scmp.eq.s32.totalorder %s15, 1
      %p95 = por %p93, %p94
      %p96 = scmp.ne.s32.totalorder %s88, %s91
      %p97 = scmp.eq.s32.totalorder %s15, 0
      %p98 = por %p96, %p97
      %p99 = scmp.ne.s32.totalorder %s88, %s91
      %p100 = scmp.eq.s32.totalorder %s20, 1
      %p101 = por %p99, %p100
      %p102 = scmp.ne.s32.totalorder %s91, %s92
      %p103 = scmp.eq.s32.totalorder %s20, 0
      %p104 = por %p102, %p103
      %p105 = scmp.ne.s32.totalorder %s91, %s92
      %p106 = scmp.eq.s32.totalorder %s21, 1
      %p107 = por %p105, %p106
      %p109 = scmp.ne.s32.totalorder %s92, %s108
      %p110 = scmp.eq.s32.totalorder %s21, 0
      %p111 = por %p109, %p110
      %p112 = scmp.le.s32.totalorder 1, %s15
      %p113 = scmp.lt.s32.totalorder %s15, 3
      %p114 = pnand %p112, %p113
      %p115 = pneg %p114
      // Predicated region
      $region9: #{sparsify_forward.1} parent=5 // pred_check
        _
      $region10: #{sparsify_forward.1} parent=5 // pred_check_branch
        %117 = sbr.rel (%p114) target = $region12
      $region11: #{sparsify_forward.1} parent=5 // pred_region
        %s118 = ssub.s32 %s15, 1
        // Predicated region
        $region13: #{sparsify_forward.1} parent=11 // pred_check
          %p119 = pneg %p76
        $region14: #{sparsify_forward.1} parent=11 // pred_check_branch
          %121 = sbr.rel (%p119) target = $region16
        $region15: #{sparsify_forward.1} parent=11 // pred_region
          _
        $region16: #{sparsify_forward.1} parent=11 // pred_fallthru
          _
      $region12: #{sparsify_forward.1} parent=5 // pred_fallthru
        _
      %p122 = scmp.lt.s32.totalorder %s15, 2
      // Predicated region
      $region17: #{sparsify_forward.1} parent=5 // pred_check
        %p123 = pneg %p122
      $region18: #{sparsify_forward.1} parent=5 // pred_check_branch
        %125 = sbr.rel (%p123) target = $region20
      $region19: #{sparsify_forward.1} parent=5 // pred_region
        // Predicated region
        $region21: #{sparsify_forward.1} parent=19 // pred_check
          %p126 = pneg %p49
        $region22: #{sparsify_forward.1} parent=19 // pred_check_branch
          %128 = sbr.rel (%p126) target = $region24
        $region23: #{sparsify_forward.1} parent=19 // pred_region
          %s129 = sand.u32 %s39, 1
          %s130 = scalar_lea.sflag [#allocation4], %s129
          %s131 = sand.u32 %s39, 1
          %s132 = smul.addr %s131, 8
          %s133 = scalar_lea.vmem [#allocation3], %s132
          %s135 = ssub.s32 128, 128
          %136 = vsyncadd %s130, %s135
          %s137 = sadd.s32 %s23, %s22
          %s138 = smul.addr %s137, 128
          %s139 = scalar_lea.hbm %s0, %s138
          %s141 = sshll.u32 %s133, 4
          %s142 = int_to_ptr.vmem [resolvable:$true] %s141
          %144 = dma.hbm_to_vmem [thread:$0]  %s139, 128, %s142, %s130
        $region24: #{sparsify_forward.1} parent=19 // pred_fallthru
          _
      $region20: #{sparsify_forward.1} parent=5 // pred_fallthru
        _
      %p145 = scmp.le.s32.totalorder 1, %s15
      %p146 = scmp.lt.s32.totalorder %s15, 3
      %p147 = pnand %p145, %p146
      %p148 = pneg %p147
      // Predicated region
      $region25: #{sparsify_forward.1} parent=5 // pred_check
        _
      $region26: #{sparsify_forward.1} parent=5 // pred_check_branch
        %150 = sbr.rel (%p147) target = $region28
      $region27: #{sparsify_forward.1} parent=5 // pred_region
        %s151 = ssub.s32 %s15, 1
        %s152 = sand.u32 %s42, 1
        %s153 = scalar_lea.sflag [#allocation4], %s152
        %s154 = sand.u32 %s42, 1
        %s155 = smul.addr %s154, 8
        %s156 = scalar_lea.vmem [#allocation3], %s155
        // Predicated region
        $region29: #{sparsify_forward.1} parent=27 // pred_check
          %p157 = pneg %p55
        $region30: #{sparsify_forward.1} parent=27 // pred_check_branch
          %159 = sbr.rel (%p157) target = $region32
        $region31: #{sparsify_forward.1} parent=27 // pred_region
          %160 = dma.done %s153, 128
        $region32: #{sparsify_forward.1} parent=27 // pred_fallthru
          _
        %s161 = sand.u32 %s42, 1
        %s162 = scalar_lea.sflag [#allocation4], %s161
        %s163 = sand.u32 %s42, 1
        %s164 = smul.addr %s163, 8
        %s165 = scalar_lea.vmem [#allocation3], %s164
        %p166 = pneg %p55
        %p167 = pneg %p52
        %p168 = pneg %p76
        %p169 = pneg %p73
        %p170 = pneg %p104
        %p171 = pneg %p101
        %s172 = sand.u32 %s91, 1
        %s173 = scalar_lea.sflag [#allocation5], %s172
        %s174 = sand.u32 %s91, 1
        %s175 = smul.addr %s174, 8
        %s176 = scalar_lea.vmem [#allocation6], %s175
        %v177 = vld [vmem:[%s156] sm:$0xff]
        %s178 = sld [smem:[#allocation2]]
        %v179 = vand.u32 2147483647, %v177
        %v180 = vstv %s178
        %vm181 = vcmp.gt.f32.partialorder %v179, %v180
        %v182 = vsel %vm181, %v177, 0.0
        %p183 = scmp.eq.s32.totalorder %s25, 0
        // Predicated region
        $region33: #{sparsify_forward.1} parent=27 // pred_check
          %p184 = pneg %p183
        $region34: #{sparsify_forward.1} parent=27 // pred_check_branch
          %186 = sbr.rel (%p184) target = $region36
        $region35: #{sparsify_forward.1} parent=27 // pred_region
          %v187 = vlaneseq
          %v188 = vshrl.u32 %v187, 7
          %vm189 = vcmp.lt.s32.totalorder %v188, 4
          %v190 = vsel %vm189, %v177, %v182
          %191 = vst [vmem:[%s176] sm:$0xff] %v190
        $region36: #{sparsify_forward.1} parent=27 // pred_fallthru
          _
        %p192 = scmp.gt.s32.totalorder %s25, 0
        // Predicated region
        $region37: #{sparsify_forward.1} parent=27 // pred_check
          %p193 = pneg %p192
        $region38: #{sparsify_forward.1} parent=27 // pred_check_branch
          %195 = sbr.rel (%p193) target = $region40
        $region39: #{sparsify_forward.1} parent=27 // pred_region
          %196 = vst [vmem:[%s176] sm:$0xff] %v182
        $region40: #{sparsify_forward.1} parent=27 // pred_fallthru
          _
        %s197 = sand.u32 %s91, 1
        %s198 = scalar_lea.sflag [#allocation5], %s197
        %s199 = sand.u32 %s91, 1
        %s200 = smul.addr %s199, 8
        %s201 = scalar_lea.vmem [#allocation6], %s200
        // Predicated region
        $region41: #{sparsify_forward.1} parent=27 // pred_check
          %p202 = pneg %p101
        $region42: #{sparsify_forward.1} parent=27 // pred_check_branch
          %204 = sbr.rel (%p202) target = $region44
        $region43: #{sparsify_forward.1} parent=27 // pred_region
          %s206 = ssub.s32 128, 128
          %207 = vsyncadd %s198, %s206
          %s208 = sadd.s32 %s25, %s24
          %s209 = smul.addr %s208, 128
          %s210 = scalar_lea.hbm %s2, %s209
          %s212 = sshll.u32 %s201, 4
          %s213 = int_to_ptr.vmem [resolvable:$true] %s212
          %215 = dma.vmem_to_hbm [thread:$0]  %s213, 128, %s210, %s198
        $region44: #{sparsify_forward.1} parent=27 // pred_fallthru
          _
      $region28: #{sparsify_forward.1} parent=5 // pred_fallthru
        _
      %p216 = scmp.le.s32.totalorder 2, %s15
      // Predicated region
      $region45: #{sparsify_forward.1} parent=5 // pred_check
        %p217 = pneg %p216
      $region46: #{sparsify_forward.1} parent=5 // pred_check_branch
        %219 = sbr.rel (%p217) target = $region48
      $region47: #{sparsify_forward.1} parent=5 // pred_region
        %s220 = ssub.s32 %s15, 2
        // Predicated region
        $region49: #{sparsify_forward.1} parent=47 // pred_check
          %p221 = pneg %p107
        $region50: #{sparsify_forward.1} parent=47 // pred_check_branch
          %223 = sbr.rel (%p221) target = $region52
        $region51: #{sparsify_forward.1} parent=47 // pred_region
          %s224 = sand.u32 %s92, 1
          %s225 = scalar_lea.sflag [#allocation5], %s224
          %s226 = sand.u32 %s92, 1
          %s227 = smul.addr %s226, 8
          %s228 = scalar_lea.vmem [#allocation6], %s227
          %229 = dma.done %s225, 128
        $region52: #{sparsify_forward.1} parent=47 // pred_fallthru
          _
      $region48: #{sparsify_forward.1} parent=5 // pred_fallthru
        _
    $region6: #{sparsify_forward.1} parent=1 // loop_footer
      %s19 = sadd.s32 1, %s15
    $region7: #{sparsify_forward.1} parent=1 // loop_footer_branch
      %14 = sbr.rel target = $region3
    $region8: #{sparsify_forward.1} parent=1 // loop_exit
      _
    %230 = vsyncpa [#allocation4], 1
    %s231 = scalar_lea.sflag [#allocation4], 1
    %232 = vsyncpa %s231, 1
    %233 = vsyncpa [#allocation5], 1
    %s234 = scalar_lea.sflag [#allocation5], 1
    %235 = vsyncpa %s234, 1

</llo_original>
